<compile_context>
chip_gen: v7x
topology: tpu7x:2x2x1
jax: 0.10.0
libtpu: 0.0.40
codegen_flags: <defaults>
</compile_context>

<pallas_src>
import functools

import jax
import jax.numpy as jnp
from jax.experimental import pallas as pl
from jax.experimental.pallas import tpu as pltpu


def _elu(v):
    # alpha=1 ELU. jnp.where evaluates both branches, so clamp the exp argument
    # to keep the untaken branch finite (also protects garbage rows in a ragged
    # last block).
    # TODO(synk): switch to jnp.expm1 if/when its Mosaic lowering is confirmed;
    # the exp(x)-1 precision loss near 0 cannot flip the hard-argmax output.
    return jnp.where(v > 0.0, v, jnp.exp(jnp.minimum(v, 0.0)) - 1.0)


def _ua_kernel(x_ref, w1_ref, b1_ref, w2_ref, b2_ref, w3_ref, b3_ref, g_ref,
               out_ref, *, elu_dtype):
    cdt = w1_ref.dtype  # bf16 MXU operand dtype

    # x arrives as f32; cast on the VPU here (hidden under the DMA) instead of
    # a separate wrapper XLA pass over HBM.
    x = x_ref[...].astype(cdt)

    # fc1 + ELU (dp1 is identity in eval mode).
    h1 = jnp.dot(x, w1_ref[...], preferred_element_type=jnp.float32) + b1_ref[...]
    h1 = _elu(h1.astype(elu_dtype)).astype(cdt)

    # fc2 + ELU (dp2 is identity in eval mode).
    h2 = jnp.dot(h1, w2_ref[...], preferred_element_type=jnp.float32) + b2_ref[...]
    h2 = _elu(h2.astype(elu_dtype)).astype(cdt)

    # fc3 -> logits (f32)
    logits = jnp.dot(h2, w3_ref[...], preferred_element_type=jnp.float32) + b3_ref[...]

    # gumbel_softmax(hard=True, tau=1): forward value == one_hot(argmax(logits+g)).
    # First-occurrence tie-break matches torch / jnp.argmax.
    y = logits + g_ref[...]
    m = jnp.max(y, axis=-1, keepdims=True)
    cols = jax.lax.broadcasted_iota(jnp.int32, y.shape, 1)
    idx = jnp.min(jnp.where(y == m, cols, y.shape[-1]), axis=-1, keepdims=True)
    out_ref[...] = (cols == idx).astype(out_ref.dtype)


def _round_up(a, m):
    return (a + m - 1) // m * m


def _row_align(dtype):
    # Sublane alignment for a batch tile of this dtype (f32->8, bf16->16, i8->32).
    return max(8, 32 // jnp.dtype(dtype).itemsize)


def _default_elu_dtype():
    # bf16 ELU only on chips with bf16 VPU/EUP (v6e, v7x, ...); f32 elsewhere.
    try:
        kind = jax.devices()[0].device_kind.lower()
    except Exception:  # pragma: no cover - defensive
        return jnp.float32
    if any(t in kind for t in ("v2", "v3", "v4", "v5")):
        return jnp.float32
    return jnp.bfloat16


def user_association_net_sl(x, params, gumbel, *, max_bm=2048, min_tiles=2,
                            compute_dtype=jnp.bfloat16, elu_dtype=None,
                            out_dtype=jnp.bfloat16):
    """Fused MLP + hard gumbel-softmax (eval-mode forward) as one Pallas kernel."""
    B, d_in = x.shape
    w1, b1, w2, b2, w3, b3 = params
    d_out = w3.shape[1]

    if elu_dtype is None:
        elu_dtype = _default_elu_dtype()

    # --- batch-tile selection ------------------------------------------------
    # Large tiles amortize the ~0.35us/grid-step overhead; >= min_tiles tiles
    # lets ("parallel",) shard the batch over both TensorCores on v7x. Pallas
    # masks the ragged last block, so no wrapper-side padding is needed.
    align = _row_align(out_dtype)
    max_bm = max(align, (max_bm // align) * align)
    if B <= align:
        bm = B  # single tile equal to the full batch dim (always legal)
    else:
        bm = min(max_bm, _round_up(pl.cdiv(B, min_tiles), align))
    n_tiles = pl.cdiv(B, bm)

    # bf16 matmul operands (tiny, one-time cast); f32 biases; f32 x/gumbel kept
    # in HBM unchanged (x is cast to bf16 inside the kernel).
    w1c, w2c, w3c = (w.astype(compute_dtype) for w in (w1, w2, w3))
    b1f, b2f, b3f = (b.astype(jnp.float32).reshape(1, -1) for b in (b1, b2, b3))
    xf = x.astype(jnp.float32)
    gf = gumbel.astype(jnp.float32)

    def resident(arr):
        # Full-array block with a constant index_map: DMA'd once, stays
        # resident in VMEM across every batch tile.
        return pl.BlockSpec(arr.shape, lambda i: (0,) * arr.ndim)

    # Per-row footprint is ~1.7 KB, so default scoped VMEM covers bm<=2048
    # everywhere; only raise the limit for very large tiles (v5e default 16 MiB).
    vmem_limit = 64 * 1024 * 1024 if bm >= 4096 else None

    kernel = functools.partial(_ua_kernel, elu_dtype=elu_dtype)

    out = pl.pallas_call(
        kernel,
        out_shape=jax.ShapeDtypeStruct((B, d_out), out_dtype),
        grid=(n_tiles,),
        in_specs=[
            pl.BlockSpec((bm, d_in), lambda i: (i, 0)),   # x (f32), tiled over batch
            resident(w1c), resident(b1f),
            resident(w2c), resident(b2f),
            resident(w3c), resident(b3f),
            pl.BlockSpec((bm, d_out), lambda i: (i, 0)),  # gumbel noise
        ],
        out_specs=pl.BlockSpec((bm, d_out), lambda i: (i, 0)),
        compiler_params=pltpu.CompilerParams(
            dimension_semantics=("parallel",),
            vmem_limit_bytes=vmem_limit),
    )(xf, w1c, b1f, w2c, b2f, w3c, b3f, gf)
    return out


def _linear_init(key, fan_in, fan_out):
    # PyTorch nn.Linear default: U(-1/sqrt(fan_in), 1/sqrt(fan_in))
    kw, kb = jax.random.split(key)
    bound = 1.0 / float(fan_in) ** 0.5
    w = jax.random.uniform(kw, (fan_in, fan_out), jnp.float32, -bound, bound)
    b = jax.random.uniform(kb, (1, fan_out), jnp.float32, -bound, bound)
    return w, b


def _reference(x, params, gumbel, compute_dtype=jnp.bfloat16,
               elu_dtype=jnp.float32):
    # Pure-JAX reference with the identical dtype policy (bf16 matmul operands,
    # f32 accumulation, ELU in elu_dtype) so the one-hot output matches exactly.
    w1, b1, w2, b2, w3, b3 = params

    def lin(a, w, b):
        return jnp.dot(a.astype(compute_dtype), w.astype(compute_dtype),
                       preferred_element_type=jnp.float32) + b.astype(jnp.float32)

    h = _elu(lin(x, w1, b1).astype(elu_dtype)).astype(compute_dtype)
    h = _elu(lin(h, w2, b2).astype(elu_dtype)).astype(compute_dtype)
    logits = lin(h, w3, b3)
    y = logits + gumbel
    return jax.nn.one_hot(jnp.argmax(y, axis=-1), y.shape[-1], dtype=jnp.float32)


def _gumbel_noise(key, shape):
    u = jax.random.uniform(key, shape, jnp.float32, 1e-10, 1.0)
    return -jnp.log(-jnp.log(u))


if __name__ == "__main__":
    INPUT_DIMS, OUTPUT_DIMS = 32, 16

    key = jax.random.PRNGKey(0)
    kx, k1, k2, k3, kg, kx2, kg2 = jax.random.split(key, 7)

    w1, b1 = _linear_init(k1, INPUT_DIMS, 128)
    w2, b2 = _linear_init(k2, 128, 64)
    w3, b3 = _linear_init(k3, 64, OUTPUT_DIMS)
    params = (w1, b1, w2, b2, w3, b3)

    elu_dtype = _default_elu_dtype()

    # Test 1: small batch, single tile.
    B = 16
    x = jax.random.normal(kx, (B, INPUT_DIMS), jnp.float32)
    gumbel = _gumbel_noise(kg, (B, OUTPUT_DIMS))
    out = user_association_net_sl(x, params, gumbel, elu_dtype=elu_dtype)
    out = jax.block_until_ready(out)
    ref = _reference(x, params, gumbel, elu_dtype=elu_dtype)
    assert out.shape == (B, OUTPUT_DIMS)
    assert jnp.allclose(out.astype(jnp.float32), ref), "mismatch (B=16)"

    # Test 2: multi-tile grid with a ragged last block (no wrapper padding).
    B2 = 40
    x2 = jax.random.normal(kx2, (B2, INPUT_DIMS), jnp.float32)
    gumbel2 = _gumbel_noise(kg2, (B2, OUTPUT_DIMS))
    out2 = user_association_net_sl(x2, params, gumbel2, elu_dtype=elu_dtype)
    out2 = jax.block_until_ready(out2)
    ref2 = _reference(x2, params, gumbel2, elu_dtype=elu_dtype)
    assert out2.shape == (B2, OUTPUT_DIMS)
    assert jnp.allclose(out2.astype(jnp.float32), ref2), "mismatch (B=40)"

    print("KERNEL_OK")
</pallas_src>

<mosaic_0001>
module attributes {stable_mosaic.version = 11 : i64} {
  func.func @_ua_kernel(%arg0: i32, %arg1: memref<16x32xf32, #tpu.memory_space<vmem>>, %arg2: memref<32x128xbf16, #tpu.memory_space<vmem>>, %arg3: memref<1x128xf32, #tpu.memory_space<vmem>>, %arg4: memref<128x64xbf16, #tpu.memory_space<vmem>>, %arg5: memref<1x64xf32, #tpu.memory_space<vmem>>, %arg6: memref<64x16xbf16, #tpu.memory_space<vmem>>, %arg7: memref<1x16xf32, #tpu.memory_space<vmem>>, %arg8: memref<16x16xf32, #tpu.memory_space<vmem>>, %arg9: memref<16x16xbf16, #tpu.memory_space<vmem>>) attributes {dimension_semantics = [#tpu.dimension_semantics<parallel>], iteration_bounds = array<i64: 1>, scalar_prefetch = 0 : i64, scratch_operands = 0 : i64, tpu.core_type = #tpu.core_type<tc>, window_params = [{transform_indices = @transform_0, window_bounds = array<i64: 16, 32>}, {pipeline_mode = #tpu.pipeline_mode<synchronous>, transform_indices = @transform_1, window_bounds = array<i64: 32, 128>}, {pipeline_mode = #tpu.pipeline_mode<synchronous>, transform_indices = @transform_2, window_bounds = array<i64: 1, 128>}, {pipeline_mode = #tpu.pipeline_mode<synchronous>, transform_indices = @transform_3, window_bounds = array<i64: 128, 64>}, {pipeline_mode = #tpu.pipeline_mode<synchronous>, transform_indices = @transform_4, window_bounds = array<i64: 1, 64>}, {pipeline_mode = #tpu.pipeline_mode<synchronous>, transform_indices = @transform_5, window_bounds = array<i64: 64, 16>}, {pipeline_mode = #tpu.pipeline_mode<synchronous>, transform_indices = @transform_6, window_bounds = array<i64: 1, 16>}, {transform_indices = @transform_7, window_bounds = array<i64: 16, 16>}, {transform_indices = @transform_8, window_bounds = array<i64: 16, 16>}]} {
    %c0 = arith.constant 0 : index
    %c0_0 = arith.constant 0 : index
    %0 = vector.load %arg1[%c0, %c0_0] : memref<16x32xf32, #tpu.memory_space<vmem>>, vector<16x32xf32>
    %1 = arith.truncf %0 : vector<16x32xf32> to vector<16x32xbf16>
    %c0_1 = arith.constant 0 : index
    %c0_2 = arith.constant 0 : index
    %2 = vector.load %arg2[%c0_1, %c0_2] : memref<32x128xbf16, #tpu.memory_space<vmem>>, vector<32x128xbf16>
    %cst = arith.constant dense<0.000000e+00> : vector<16x128xf32>
    %3 = tpu.matmul %1, %2, %cst {dimension_numbers = #tpu.dot_dimension_numbers<[1], [0], [0], [1], [0, 0, 1, 1], [], []>} : vector<16x32xbf16>, vector<32x128xbf16>, vector<16x128xf32> -> vector<16x128xf32>
    %c0_3 = arith.constant 0 : index
    %c0_4 = arith.constant 0 : index
    %4 = vector.load %arg3[%c0_3, %c0_4] : memref<1x128xf32, #tpu.memory_space<vmem>>, vector<1x128xf32>
    %5 = vector.broadcast %4 : vector<1x128xf32> to vector<16x128xf32>
    %6 = arith.addf %3, %5 : vector<16x128xf32>
    %7 = arith.truncf %6 : vector<16x128xf32> to vector<16x128xbf16>
    %cst_5 = arith.constant 0.000000e+00 : bf16
    %8 = vector.broadcast %cst_5 : bf16 to vector<16x128xbf16>
    %9 = arith.cmpf ogt, %7, %8 : vector<16x128xbf16>
    %cst_6 = arith.constant 0.000000e+00 : bf16
    %10 = vector.broadcast %cst_6 : bf16 to vector<16x128xbf16>
    %11 = arith.minimumf %7, %10 : vector<16x128xbf16>
    %12 = math.exp %11 : vector<16x128xbf16>
    %cst_7 = arith.constant 1.000000e+00 : bf16
    %13 = vector.broadcast %cst_7 : bf16 to vector<16x128xbf16>
    %14 = arith.subf %12, %13 : vector<16x128xbf16>
    %15 = arith.select %9, %7, %14 : vector<16x128xi1>, vector<16x128xbf16>
    %c0_8 = arith.constant 0 : index
    %c0_9 = arith.constant 0 : index
    %16 = vector.load %arg4[%c0_8, %c0_9] : memref<128x64xbf16, #tpu.memory_space<vmem>>, vector<128x64xbf16>
    %cst_10 = arith.constant dense<0.000000e+00> : vector<16x64xf32>
    %17 = tpu.matmul %15, %16, %cst_10 {dimension_numbers = #tpu.dot_dimension_numbers<[1], [0], [0], [1], [0, 0, 1, 1], [], []>} : vector<16x128xbf16>, vector<128x64xbf16>, vector<16x64xf32> -> vector<16x64xf32>
    %c0_11 = arith.constant 0 : index
    %c0_12 = arith.constant 0 : index
    %18 = vector.load %arg5[%c0_11, %c0_12] : memref<1x64xf32, #tpu.memory_space<vmem>>, vector<1x64xf32>
    %19 = vector.broadcast %18 : vector<1x64xf32> to vector<16x64xf32>
    %20 = arith.addf %17, %19 : vector<16x64xf32>
    %21 = arith.truncf %20 : vector<16x64xf32> to vector<16x64xbf16>
    %cst_13 = arith.constant 0.000000e+00 : bf16
    %22 = vector.broadcast %cst_13 : bf16 to vector<16x64xbf16>
    %23 = arith.cmpf ogt, %21, %22 : vector<16x64xbf16>
    %cst_14 = arith.constant 0.000000e+00 : bf16
    %24 = vector.broadcast %cst_14 : bf16 to vector<16x64xbf16>
    %25 = arith.minimumf %21, %24 : vector<16x64xbf16>
    %26 = math.exp %25 : vector<16x64xbf16>
    %cst_15 = arith.constant 1.000000e+00 : bf16
    %27 = vector.broadcast %cst_15 : bf16 to vector<16x64xbf16>
    %28 = arith.subf %26, %27 : vector<16x64xbf16>
    %29 = arith.select %23, %21, %28 : vector<16x64xi1>, vector<16x64xbf16>
    %c0_16 = arith.constant 0 : index
    %c0_17 = arith.constant 0 : index
    %30 = vector.load %arg6[%c0_16, %c0_17] : memref<64x16xbf16, #tpu.memory_space<vmem>>, vector<64x16xbf16>
    %cst_18 = arith.constant dense<0.000000e+00> : vector<16x16xf32>
    %31 = tpu.matmul %29, %30, %cst_18 {dimension_numbers = #tpu.dot_dimension_numbers<[1], [0], [0], [1], [0, 0, 1, 1], [], []>} : vector<16x64xbf16>, vector<64x16xbf16>, vector<16x16xf32> -> vector<16x16xf32>
    %c0_19 = arith.constant 0 : index
    %c0_20 = arith.constant 0 : index
    %32 = vector.load %arg7[%c0_19, %c0_20] : memref<1x16xf32, #tpu.memory_space<vmem>>, vector<1x16xf32>
    %33 = vector.broadcast %32 : vector<1x16xf32> to vector<16x16xf32>
    %34 = arith.addf %31, %33 : vector<16x16xf32>
    %c0_21 = arith.constant 0 : index
    %c0_22 = arith.constant 0 : index
    %35 = vector.load %arg8[%c0_21, %c0_22] : memref<16x16xf32, #tpu.memory_space<vmem>>, vector<16x16xf32>
    %36 = arith.addf %34, %35 : vector<16x16xf32>
    %cst_23 = arith.constant dense<0xFF800000> : vector<16xf32>
    %37 = vector.multi_reduction <maximumf>, %36, %cst_23 [1] : vector<16x16xf32> to vector<16xf32>
    %38 = vector.shape_cast %37 : vector<16xf32> to vector<16x1xf32>
    %39 = tpu.iota {dimensions = array<i32: 1>} : vector<16x16xi32>
    %40 = vector.broadcast %38 : vector<16x1xf32> to vector<16x16xf32>
    %41 = arith.cmpf oeq, %36, %40 : vector<16x16xf32>
    %c16_i32 = arith.constant 16 : i32
    %42 = vector.broadcast %c16_i32 : i32 to vector<16x16xi32>
    %43 = arith.select %41, %39, %42 : vector<16x16xi1>, vector<16x16xi32>
    %cst_24 = arith.constant dense<2147483647> : vector<16xi32>
    %44 = vector.multi_reduction <minsi>, %43, %cst_24 [1] : vector<16x16xi32> to vector<16xi32>
    %45 = vector.shape_cast %44 : vector<16xi32> to vector<16x1xi32>
    %46 = vector.broadcast %45 : vector<16x1xi32> to vector<16x16xi32>
    %47 = arith.cmpi eq, %39, %46 : vector<16x16xi32>
    %48 = arith.extui %47 : vector<16x16xi1> to vector<16x16xi32>
    %49 = arith.sitofp %48 : vector<16x16xi32> to vector<16x16xf32>
    %50 = arith.truncf %49 : vector<16x16xf32> to vector<16x16xbf16>
    %c0_25 = arith.constant 0 : index
    %c0_26 = arith.constant 0 : index
    %51 = vector.load %arg9[%c0_25, %c0_26] : memref<16x16xbf16, #tpu.memory_space<vmem>>, vector<16x16xbf16>
    tpu.vector_store %arg9[%c0_25, %c0_26], %50 {strides = array<i32>} : memref<16x16xbf16, #tpu.memory_space<vmem>>, vector<16x16xbf16>,
    return
  }
  func.func @transform_0(%arg0: i32) -> (i32, i32) {
    %c0_i32 = arith.constant 0 : i32
    %c0_i32_0 = arith.constant 0 : i32
    return %arg0, %c0_i32 : i32, i32
  }
  func.func @transform_1(%arg0: i32) -> (i32, i32) {
    %c0_i32 = arith.constant 0 : i32
    %c0_i32_0 = arith.constant 0 : i32
    %c0_i32_1 = arith.constant 0 : i32
    return %c0_i32, %c0_i32_0 : i32, i32
  }
  func.func @transform_2(%arg0: i32) -> (i32, i32) {
    %c0_i32 = arith.constant 0 : i32
    %c0_i32_0 = arith.constant 0 : i32
    %c0_i32_1 = arith.constant 0 : i32
    return %c0_i32, %c0_i32_0 : i32, i32
  }
  func.func @transform_3(%arg0: i32) -> (i32, i32) {
    %c0_i32 = arith.constant 0 : i32
    %c0_i32_0 = arith.constant 0 : i32
    %c0_i32_1 = arith.constant 0 : i32
    return %c0_i32, %c0_i32_0 : i32, i32
  }
  func.func @transform_4(%arg0: i32) -> (i32, i32) {
    %c0_i32 = arith.constant 0 : i32
    %c0_i32_0 = arith.constant 0 : i32
    %c0_i32_1 = arith.constant 0 : i32
    return %c0_i32, %c0_i32_0 : i32, i32
  }
  func.func @transform_5(%arg0: i32) -> (i32, i32) {
    %c0_i32 = arith.constant 0 : i32
    %c0_i32_0 = arith.constant 0 : i32
    %c0_i32_1 = arith.constant 0 : i32
    return %c0_i32, %c0_i32_0 : i32, i32
  }
  func.func @transform_6(%arg0: i32) -> (i32, i32) {
    %c0_i32 = arith.constant 0 : i32
    %c0_i32_0 = arith.constant 0 : i32
    %c0_i32_1 = arith.constant 0 : i32
    return %c0_i32, %c0_i32_0 : i32, i32
  }
  func.func @transform_7(%arg0: i32) -> (i32, i32) {
    %c0_i32 = arith.constant 0 : i32
    %c0_i32_0 = arith.constant 0 : i32
    return %arg0, %c0_i32 : i32, i32
  }
  func.func @transform_8(%arg0: i32) -> (i32, i32) {
    %c0_i32 = arith.constant 0 : i32
    %c0_i32_0 = arith.constant 0 : i32
    return %arg0, %c0_i32 : i32, i32
  }
}

</mosaic_0001>

<llo_original>
// kernel: tpu_custom_call.1
$region0: #{tpu_custom_call.1}
  #allocation0 [shape = 'u32[]', space=smem, size = 0x4, offset = 0x4, fixed_abs, tag = 'smem constant byte address 0x4 - core index']
  #allocation1 [shape = 'u32[144,128]{1,0:T(1,128)}', space=vmem, size = 0x12000, scoped, tag = 'internal scratch']
  %s0 = inlined_call_operand.vmem [shape: f32[16,32], index: 0, kind: input, shape index: {}]
  %s1 = inlined_call_operand.vmem [shape: bf16[32,128], index: 1, kind: input, shape index: {}]
  %s2 = inlined_call_operand.vmem [shape: f32[1,128], index: 2, kind: input, shape index: {}]
  %s3 = inlined_call_operand.vmem [shape: bf16[128,64], index: 3, kind: input, shape index: {}]
  %s4 = inlined_call_operand.vmem [shape: f32[1,64], index: 4, kind: input, shape index: {}]
  %s5 = inlined_call_operand.vmem [shape: bf16[64,16], index: 5, kind: input, shape index: {}]
  %s6 = inlined_call_operand.vmem [shape: f32[1,16], index: 6, kind: input, shape index: {}]
  %s7 = inlined_call_operand.vmem [shape: f32[16,16], index: 7, kind: input, shape index: {}]
  %s8 = inlined_call_operand.hbm [shape: bf16[16,16], index: 8, kind: output, shape index: {}]
  %s9 = sld [smem:[#allocation0]]
  $region42: #{tpu_custom_call.1} parent=0
    _
  %s11 = ssub.s32 1, %s9
  %s12 = scalar_select 0, %s11, %s9
  $region1: #{tpu_custom_call.1} parent=0
    #allocation2 [shape = 'u8[4096]{0}', space=vmem, size = 0x1000, scoped, tag = 'output window, operand 0, single buffered']
    #allocation3 [shape = 's32[1]{0}', space=sflag, size = 0x4, scoped, tag = 'scoped memory for tpu_custom_call.1']
    %13 = vsyncpa [#allocation3], 0
    // Predicated region
    $region2: #{tpu_custom_call.1} parent=1 // pred_check
      _
    $region3: #{tpu_custom_call.1} parent=1 // pred_check_branch
      %15 = sbr.rel (0) target = $region5
    $region4: #{tpu_custom_call.1} parent=1 // pred_region
      _
    $region5: #{tpu_custom_call.1} parent=1 // pred_fallthru
      _
    // Predicated region
    $region6: #{tpu_custom_call.1} parent=1 // pred_check
      _
    $region7: #{tpu_custom_call.1} parent=1 // pred_check_branch
      %17 = sbr.rel (0) target = $region9
    $region8: #{tpu_custom_call.1} parent=1 // pred_region
      _
    $region9: #{tpu_custom_call.1} parent=1 // pred_fallthru
      _
    // Predicated region
    $region10: #{tpu_custom_call.1} parent=1 // pred_check
      _
    $region11: #{tpu_custom_call.1} parent=1 // pred_check_branch
      %19 = sbr.rel (0) target = $region13
    $region12: #{tpu_custom_call.1} parent=1 // pred_region
      _
    $region13: #{tpu_custom_call.1} parent=1 // pred_fallthru
      _
    // Predicated region
    $region14: #{tpu_custom_call.1} parent=1 // pred_check
      _
    $region15: #{tpu_custom_call.1} parent=1 // pred_check_branch
      %21 = sbr.rel (0) target = $region17
    $region16: #{tpu_custom_call.1} parent=1 // pred_region
      _
    $region17: #{tpu_custom_call.1} parent=1 // pred_fallthru
      _
    // Predicated region
    $region18: #{tpu_custom_call.1} parent=1 // pred_check
      _
    $region19: #{tpu_custom_call.1} parent=1 // pred_check_branch
      %23 = sbr.rel (0) target = $region21
    $region20: #{tpu_custom_call.1} parent=1 // pred_region
      _
    $region21: #{tpu_custom_call.1} parent=1 // pred_fallthru
      _
    // Predicated region
    $region22: #{tpu_custom_call.1} parent=1 // pred_check
      _
    $region23: #{tpu_custom_call.1} parent=1 // pred_check_branch
      %25 = sbr.rel (0) target = $region25
    $region24: #{tpu_custom_call.1} parent=1 // pred_region
      _
    $region25: #{tpu_custom_call.1} parent=1 // pred_fallthru
      _
    // Predicated region
    $region26: #{tpu_custom_call.1} parent=1 // pred_check
      _
    $region27: #{tpu_custom_call.1} parent=1 // pred_check_branch
      %27 = sbr.rel (0) target = $region29
    $region28: #{tpu_custom_call.1} parent=1 // pred_region
      _
    $region29: #{tpu_custom_call.1} parent=1 // pred_fallthru
      _
    // Predicated region
    $region30: #{tpu_custom_call.1} parent=1 // pred_check
      _
    $region31: #{tpu_custom_call.1} parent=1 // pred_check_branch
      %29 = sbr.rel (0) target = $region33
    $region32: #{tpu_custom_call.1} parent=1 // pred_region
      _
    $region33: #{tpu_custom_call.1} parent=1 // pred_fallthru
      _
    %v32 = vld [vmem:[%s0] sm:$0xff]
    %v33 = vld [vmem:[%s0 + $0x8] sm:$0xff]
    %v34 = vpack.c.bf16 %v33, %v32
    %v35 = vld [vmem:[%s1] sm:$0xf]
    %v36 = vld [vmem:[%s1 + $0x4] sm:$0xf]
    %v37 = vld [vmem:[%s1 + $0x8] sm:$0xf]
    %v38 = vld [vmem:[%s1 + $0xc] sm:$0xf]
    %v39 = vld [vmem:[%s2] sm:$0x1]
    %v41 = vlaneseq
    %v42 = vshrl.u32 %v41, 7
    %v43 = vsub.s32 0, %v42
    %v44 = vrot.slane %v39, %v43
    %v50 = vunpack.c.l.b16 %v35
    %v51 = vunpack.c.l.b16 %v36
    %v52 = vunpack.c.l.b16 %v37
    %v53 = vunpack.c.l.b16 %v38
    %v54 = vpack.c.b16 %v51, %v50
    %v55 = vpack.c.b16 %v53, %v52
    %vm58 = vcmask 261120
    %v60 = vsel %vm58, %v34, 0
    %62 = vmatprep.subr.bf16.mxu0 0
    %63 = vmatpush1.bf16.msra.mxu0 %v54
    %64 = vmatprep.subr.bf16.mxu0 0
    %65 = vmatpush1.bf16.msra.mxu0 %v55
    %66 = vmatprep.subr.bf16.mxu0 0
    %67 = vmatpush1.bf16.msra.mxu0 0
    %68 = vmatprep.subr.bf16.mxu0 0
    %69 = vmatpush1.bf16.msra.mxu0 0
    %70 = vmatprep.subr.bf16.mxu0 0
    %71 = vmatpush1.bf16.msra.mxu0 0
    %72 = vmatprep.subr.bf16.mxu0 0
    %73 = vmatpush1.bf16.msra.mxu0 0
    %74 = vmatprep.subr.bf16.mxu0 0
    %75 = vmatpush1.bf16.msra.mxu0 0
    %76 = vmatprep.subr.bf16.mxu0 0
    %77 = vmatpush1.bf16.msra.mxu0 0
    %78 = vmatprep.subr.bf16.mxu0 0
    %79 = vmatpush1.bf16.msra.mxu0 0
    %80 = vmatprep.subr.bf16.mxu0 0
    %81 = vmatpush1.bf16.msra.mxu0 0
    %82 = vmatprep.subr.bf16.mxu0 0
    %83 = vmatpush1.bf16.msra.mxu0 0
    %84 = vmatprep.subr.bf16.mxu0 0
    %85 = vmatpush1.bf16.msra.mxu0 0
    %86 = vmatprep.subr.bf16.mxu0 0
    %87 = vmatpush1.bf16.msra.mxu0 0
    %88 = vmatprep.subr.bf16.mxu0 0
    %89 = vmatpush1.bf16.msra.mxu0 0
    %90 = vmatprep.subr.bf16.mxu0 0
    %91 = vmatpush1.bf16.msra.mxu0 0
    %92 = vmatprep.subr.bf16.mxu0 0
    %93 = vmatpush1.bf16.msra.mxu0 0
    %94 = vmatprep.mubr.bf16.mxu0 0
    %95 = vmatmul.mubr.bf16.gmra.mrb[0].mxu0 %v60
    %v96 = vpop.f32.mrb[0].mxu0
    %v97 = vadd.f32 %v44, %v96
    %v98 = vpop.f32.mrb[0].mxu0
    %v99 = vpop.f32.mrb[0].mxu0
    %v100 = vadd.f32 %v44, %v99
    %v101 = vpop.f32.mrb[0].mxu0
    %102 = vdwg.mxu0
    %v103 = vpack.c.bf16 %v100, %v97
    %vm104 = vcmp.gt.bf16.partialorder %v103, 0
    %v105 = vmin.bf16 %v103, 0
    %v107 = vmul.bf16 %v105, 1069105081
    %v108 = vpow.bf16.pop %v107
    %v109 = vsub.bf16 %v108, 1065369472
    %v110 = vsel %vm104, %v103, %v109
    %v111 = vld [vmem:[%s3] sm:$0xf]
    %v112 = vld [vmem:[%s3 + $0x4] sm:$0xf]
    %v113 = vld [vmem:[%s3 + $0x8] sm:$0xf]
    %v114 = vld [vmem:[%s3 + $0xc] sm:$0xf]
    %v115 = vld [vmem:[%s3 + $0x10] sm:$0xf]
    %v116 = vld [vmem:[%s3 + $0x14] sm:$0xf]
    %v117 = vld [vmem:[%s3 + $0x18] sm:$0xf]
    %v118 = vld [vmem:[%s3 + $0x1c] sm:$0xf]
    %v119 = vld [vmem:[%s3 + $0x20] sm:$0xf]
    %v120 = vld [vmem:[%s3 + $0x24] sm:$0xf]
    %v121 = vld [vmem:[%s3 + $0x28] sm:$0xf]
    %v122 = vld [vmem:[%s3 + $0x2c] sm:$0xf]
    %v123 = vld [vmem:[%s3 + $0x30] sm:$0xf]
    %v124 = vld [vmem:[%s3 + $0x34] sm:$0xf]
    %v125 = vld [vmem:[%s3 + $0x38] sm:$0xf]
    %v126 = vld [vmem:[%s3 + $0x3c] sm:$0xf]
    %v127 = vld [vmem:[%s4] sm:$0x1]
    %v129 = vlaneseq
    %v130 = vshrl.u32 %v129, 7
    %v131 = vsub.s32 0, %v130
    %v132 = vrot.slane %v127, %v131
    %v150 = vunpack.c.l.b16 %v111
    %v151 = vunpack.c.l.b16 %v112
    %v152 = vunpack.c.l.b16 %v113
    %v153 = vunpack.c.l.b16 %v114
    %v154 = vunpack.c.l.b16 %v115
    %v155 = vunpack.c.l.b16 %v116
    %v156 = vunpack.c.l.b16 %v117
    %v157 = vunpack.c.l.b16 %v118
    %v158 = vunpack.c.l.b16 %v119
    %v159 = vunpack.c.l.b16 %v120
    %v160 = vunpack.c.l.b16 %v121
    %v161 = vunpack.c.l.b16 %v122
    %v162 = vunpack.c.l.b16 %v123
    %v163 = vunpack.c.l.b16 %v124
    %v164 = vunpack.c.l.b16 %v125
    %v165 = vunpack.c.l.b16 %v126
    %v166 = vpack.c.b16 %v151, %v150
    %v167 = vpack.c.b16 %v153, %v152
    %v168 = vpack.c.b16 %v155, %v154
    %v169 = vpack.c.b16 %v157, %v156
    %v170 = vpack.c.b16 %v159, %v158
    %v171 = vpack.c.b16 %v161, %v160
    %v172 = vpack.c.b16 %v163, %v162
    %v173 = vpack.c.b16 %v165, %v164
    %182 = vmatprep.subr.bf16.mxu0 0
    %183 = vmatpush1.bf16.msra.mxu0 %v166
    %184 = vmatprep.subr.bf16.mxu0 0
    %185 = vmatpush1.bf16.msra.mxu0 %v167
    %186 = vmatprep.subr.bf16.mxu0 0
    %187 = vmatpush1.bf16.msra.mxu0 %v168
    %188 = vmatprep.subr.bf16.mxu0 0
    %189 = vmatpush1.bf16.msra.mxu0 %v169
    %190 = vmatprep.subr.bf16.mxu0 0
    %191 = vmatpush1.bf16.msra.mxu0 %v170
    %192 = vmatprep.subr.bf16.mxu0 0
    %193 = vmatpush1.bf16.msra.mxu0 %v171
    %194 = vmatprep.subr.bf16.mxu0 0
    %195 = vmatpush1.bf16.msra.mxu0 %v172
    %196 = vmatprep.subr.bf16.mxu0 0
    %197 = vmatpush1.bf16.msra.mxu0 %v173
    %198 = vmatprep.subr.bf16.mxu0 0
    %199 = vmatpush1.bf16.msra.mxu0 0
    %200 = vmatprep.subr.bf16.mxu0 0
    %201 = vmatpush1.bf16.msra.mxu0 0
    %202 = vmatprep.subr.bf16.mxu0 0
    %203 = vmatpush1.bf16.msra.mxu0 0
    %204 = vmatprep.subr.bf16.mxu0 0
    %205 = vmatpush1.bf16.msra.mxu0 0
    %206 = vmatprep.subr.bf16.mxu0 0
    %207 = vmatpush1.bf16.msra.mxu0 0
    %208 = vmatprep.subr.bf16.mxu0 0
    %209 = vmatpush1.bf16.msra.mxu0 0
    %210 = vmatprep.subr.bf16.mxu0 0
    %211 = vmatpush1.bf16.msra.mxu0 0
    %212 = vmatprep.subr.bf16.mxu0 0
    %213 = vmatpush1.bf16.msra.mxu0 0
    %214 = vmatprep.mubr.bf16.mxu0 0
    %215 = vmatmul.mubr.bf16.gmra.mrb[0].mxu0 %v110
    %v216 = vpop.f32.mrb[0].mxu0
    %v217 = vadd.f32 %v132, %v216
    %v218 = vpop.f32.mrb[0].mxu0
    %v219 = vpop.f32.mrb[0].mxu0
    %v220 = vadd.f32 %v132, %v219
    %v221 = vpop.f32.mrb[0].mxu0
    %222 = vdwg.mxu0
    %v223 = vpack.c.bf16 %v220, %v217
    %vm224 = vcmp.gt.bf16.partialorder %v223, 0
    %v225 = vmin.bf16 %v223, 0
    %v227 = vmul.bf16 %v225, 1069105081
    %v228 = vpow.bf16.pop %v227
    %v229 = vsub.bf16 %v228, 1065369472
    %v230 = vsel %vm224, %v223, %v229
    %v231 = vld [vmem:[%s5] sm:$0xf]
    %v232 = vld [vmem:[%s5 + $0x4] sm:$0xf]
    %v233 = vld [vmem:[%s5 + $0x8] sm:$0xf]
    %v234 = vld [vmem:[%s5 + $0xc] sm:$0xf]
    %v235 = vld [vmem:[%s5 + $0x10] sm:$0xf]
    %v236 = vld [vmem:[%s5 + $0x14] sm:$0xf]
    %v237 = vld [vmem:[%s5 + $0x18] sm:$0xf]
    %v238 = vld [vmem:[%s5 + $0x1c] sm:$0xf]
    %v239 = vld [vmem:[%s6] sm:$0x1]
    %v241 = vlaneseq
    %v242 = vshrl.u32 %v241, 7
    %v243 = vsub.s32 0, %v242
    %v244 = vrot.slane %v239, %v243
    %v254 = vunpack.c.l.b16 %v231
    %v255 = vunpack.c.l.b16 %v232
    %v256 = vunpack.c.l.b16 %v233
    %v257 = vunpack.c.l.b16 %v234
    %v258 = vunpack.c.l.b16 %v235
    %v259 = vunpack.c.l.b16 %v236
    %v260 = vunpack.c.l.b16 %v237
    %v261 = vunpack.c.l.b16 %v238
    %v262 = vpack.c.b16 %v255, %v254
    %v263 = vpack.c.b16 %v257, %v256
    %v264 = vpack.c.b16 %v259, %v258
    %v265 = vpack.c.b16 %v261, %v260
    %vm270 = vcmask 523264
    %v272 = vsel %vm270, %v230, 0
    %274 = vmatprep.subr.bf16.mxu0 0
    %275 = vmatpush1.bf16.msra.mxu0 %v262
    %276 = vmatprep.subr.bf16.mxu0 0
    %277 = vmatpush1.bf16.msra.mxu0 %v263
    %278 = vmatprep.subr.bf16.mxu0 0
    %279 = vmatpush1.bf16.msra.mxu0 %v264
    %280 = vmatprep.subr.bf16.mxu0 0
    %281 = vmatpush1.bf16.msra.mxu0 %v265
    %282 = vmatprep.subr.bf16.mxu0 0
    %283 = vmatpush1.bf16.msra.mxu0 0
    %284 = vmatprep.subr.bf16.mxu0 0
    %285 = vmatpush1.bf16.msra.mxu0 0
    %286 = vmatprep.subr.bf16.mxu0 0
    %287 = vmatpush1.bf16.msra.mxu0 0
    %288 = vmatprep.subr.bf16.mxu0 0
    %289 = vmatpush1.bf16.msra.mxu0 0
    %290 = vmatprep.subr.bf16.mxu0 0
    %291 = vmatpush1.bf16.msra.mxu0 0
    %292 = vmatprep.subr.bf16.mxu0 0
    %293 = vmatpush1.bf16.msra.mxu0 0
    %294 = vmatprep.subr.bf16.mxu0 0
    %295 = vmatpush1.bf16.msra.mxu0 0
    %296 = vmatprep.subr.bf16.mxu0 0
    %297 = vmatpush1.bf16.msra.mxu0 0
    %298 = vmatprep.subr.bf16.mxu0 0
    %299 = vmatpush1.bf16.msra.mxu0 0
    %300 = vmatprep.subr.bf16.mxu0 0
    %301 = vmatpush1.bf16.msra.mxu0 0
    %302 = vmatprep.subr.bf16.mxu0 0
    %303 = vmatpush1.bf16.msra.mxu0 0
    %304 = vmatprep.subr.bf16.mxu0 0
    %305 = vmatpush1.bf16.msra.mxu0 0
    %306 = vmatprep.mubr.bf16.mxu0 0
    %307 = vmatmul.mubr.bf16.gmra.mrb[0].mxu0 %v272
    %v308 = vpop.f32.mrb[0].mxu0
    %v309 = vadd.f32 %v244, %v308
    %v310 = vpop.f32.mrb[0].mxu0
    %v311 = vpop.f32.mrb[0].mxu0
    %v312 = vadd.f32 %v244, %v311
    %v313 = vpop.f32.mrb[0].mxu0
    %314 = vdwg.mxu0
    %v315 = vld [vmem:[%s7] sm:$0xff]
    %v316 = vld [vmem:[%s7 + $0x8] sm:$0xff]
    %v317 = vadd.f32 %v309, %v315
    %v318 = vadd.f32 %v312, %v316
    %vm319 = vcmask 130048
    %v320 = vsel %vm319, %v317, -inf
    %321 = vmax.xlane.f32.xlu0 %v320
    %v322 = vpop.xlane.xlu0 %321
    %v323 = vsel %vm319, %v318, -inf
    %324 = vmax.xlane.f32.xlu0 %v323
    %v325 = vpop.xlane.xlu0 %324
    %v326 = vlaneseq
    %v327 = vand.u32 %v326, 127
    %vm328 = vcmp.eq.f32.partialorder %v317, %v322
    %vm329 = vcmp.eq.f32.partialorder %v318, %v325
    %v330 = vsel %vm328, %v327, 16
    %v331 = vsel %vm329, %v327, 16
    %v332 = vsel %vm319, %v330, 2147483647
    %v333 = vand.u32 %v332, 65535
    %v334 = vshra.s32 %v332, 16
    %v335 = vcvt.s32.f32 %v333
    %v336 = vcvt.s32.f32 %v334
    %337 = vmin.xlane.f32.xlu0 %v336
    %v338 = vpop.xlane.xlu0 %337
    %vm339 = vcmp.eq.f32.partialorder %v336, %v338
    %v340 = vsel %vm339, %v335, inf
    %341 = vmin.xlane.f32.xlu0 %v340
    %v342 = vpop.xlane.xlu0 %341
    %v343 = vcvt.f32.s32 %v342
    %v344 = vcvt.f32.s32 %v338
    %v345 = vshll.u32 %v344, 16
    %v346 = vadd.s32 %v345, %v343
    %v347 = vsel %vm319, %v331, 2147483647
    %v348 = vand.u32 %v347, 65535
    %v349 = vshra.s32 %v347, 16
    %v350 = vcvt.s32.f32 %v348
    %v351 = vcvt.s32.f32 %v349
    %352 = vmin.xlane.f32.xlu0 %v351
    %v353 = vpop.xlane.xlu0 %352
    %vm354 = vcmp.eq.f32.partialorder %v351, %v353
    %v355 = vsel %vm354, %v350, inf
    %356 = vmin.xlane.f32.xlu0 %v355
    %v357 = vpop.xlane.xlu0 %356
    %v358 = vcvt.f32.s32 %v357
    %v359 = vcvt.f32.s32 %v353
    %v360 = vshll.u32 %v359, 16
    %v361 = vadd.s32 %v360, %v358
    %vm362 = vcmp.eq.s32.totalorder %v327, %v346
    %vm363 = vcmp.eq.s32.totalorder %v327, %v361
    %v364 = vsel %vm362, 1, 0
    %v365 = vsel %vm363, 1, 0
    %v366 = vcvt.s32.f32 %v364
    %v367 = vcvt.s32.f32 %v365
    %v368 = vpack.c.bf16 %v367, %v366
    %v370 = vunpack.c.l.b16 %v368
    %v371 = vunpack.c.h.b16 %v368
    %v372 = vpack.c.b16 %v370, %v370
    %v373 = vpack.c.b16 %v371, %v371
    %vm376 = vcmask 125952
    %377 = vst.msk [vmem:[#allocation2] sm:$0xf] %vm376, %v372
    %378 = vst.msk [vmem:[#allocation2 + $0x4] sm:$0xf] %vm376, %v373
    // Predicated region
    $region34: #{tpu_custom_call.1} parent=1 // pred_check
      _
    $region35: #{tpu_custom_call.1} parent=1 // pred_check_branch
      %380 = sbr.rel (0) target = $region37
    $region36: #{tpu_custom_call.1} parent=1 // pred_region
      %s382 = ssub.s32 128, 128
      %383 = vsyncadd [#allocation3], %s382
      %s384 = sshll.u32 [#allocation2], 4
      %s385 = int_to_ptr.vmem [resolvable:$true] %s384
      %390 = dma.vmem_to_hbm [thread:$0]  %s385, 128, %s8, [#allocation3], 64, 64, 4
    $region37: #{tpu_custom_call.1} parent=1 // pred_fallthru
      _
    // Predicated region
    $region38: #{tpu_custom_call.1} parent=1 // pred_check
      _
    $region39: #{tpu_custom_call.1} parent=1 // pred_check_branch
      %392 = sbr.rel (0) target = $region41
    $region40: #{tpu_custom_call.1} parent=1 // pred_region
      %393 = dma.done [#allocation3], 128
    $region41: #{tpu_custom_call.1} parent=1 // pred_fallthru
      _
    %394 = vsyncpa [#allocation3], 1

</llo_original>
